<compile_context>
chip_gen: v6e
topology: v6e:2x2x1
jax: 0.10.0
libtpu: 0.0.40
codegen_flags: <defaults>
</compile_context>

<pallas_src>
import functools

import jax
import jax.numpy as jnp
from jax.experimental import pallas as pl
from jax.experimental.pallas import tpu as pltpu


def _round_up(n, m):
    return ((n + m - 1) // m) * m


def _largest_tile(dim, candidates):
    for c in candidates:
        if dim % c == 0:
            return c
    return dim


# --------------------------------------------------------------------------
# Phase 1: hoisted GEMM  Y = X @ W.T   (bf16 x bf16 operands, f32 accumulate)
# --------------------------------------------------------------------------
def _matmul_kernel(a_ref, b_ref, o_ref, acc_ref):
    k = pl.program_id(2)

    @pl.when(k == 0)
    def _():
        acc_ref[...] = jnp.zeros_like(acc_ref)

    acc_ref[...] += jnp.dot(a_ref[...], b_ref[...],
                            preferred_element_type=jnp.float32)

    @pl.when(k == pl.num_programs(2) - 1)
    def _():
        o_ref[...] = acc_ref[...]


def _project_inputs(a_bf16, b_bf16):
    """(M, K) @ (K, N) Pallas tiled matmul; bf16 inputs, f32 output."""
    M, K = a_bf16.shape
    _, N = b_bf16.shape
    tm = _largest_tile(M, (256, 128, 64, 32, 16))
    tn = _largest_tile(N, (256, 128))
    tk = _largest_tile(K, (512, 256, 128))
    grid = (M // tm, N // tn, K // tk)
    return pl.pallas_call(
        _matmul_kernel,
        out_shape=jax.ShapeDtypeStruct((M, N), jnp.float32),
        grid=grid,
        in_specs=[pl.BlockSpec((tm, tk), lambda i, j, k: (i, k)),
                  pl.BlockSpec((tk, tn), lambda i, j, k: (k, j))],
        out_specs=pl.BlockSpec((tm, tn), lambda i, j, k: (i, j)),
        scratch_shapes=[pltpu.VMEM((tm, tn), jnp.float32)],
        compiler_params=pltpu.CompilerParams(
            dimension_semantics=("parallel", "parallel", "arbitrary"),
            vmem_limit_bytes=32 * 1024 * 1024),
    )(a_bf16, b_bf16)


# --------------------------------------------------------------------------
# Phase 2: serial recurrence over time — pure element-wise (VPU only)
# --------------------------------------------------------------------------
def _esnn_recurrence_kernel(params_ref, y_ref, v0_ref, pw0_ref, s0_ref,
                            spikes_ref, v_out_ref,
                            v_sc, pw_sc, s_sc,
                            *, tt, t_valid, guard_tail):
    tb = pl.program_id(1)                      # time-block index (serial axis)

    @pl.when(tb == 0)
    def _init():                               # per batch-block initial state
        v_sc[...] = v0_ref[...]
        pw_sc[...] = pw0_ref[...]
        s_sc[...] = s0_ref[...]

    alpha = params_ref[0]
    beta = params_ref[1]
    sigma = params_ref[2]
    lam = params_ref[3]

    # Keep the recurrent state in registers across the unrolled time loop.
    v = v_sc[...]
    pw = pw_sc[...]
    s = s_sc[...]

    for i in range(tt):                        # statically unrolled
        pw_new = alpha * pw + beta * y_ref[i]          # pspW recurrence
        v_new = lam * v + pw_new - sigma * s           # membrane voltage
        spike = (v_new > 1.0).astype(jnp.float32)      # max(0, sign(v-1))
        spikes_ref[i] = spike.astype(spikes_ref.dtype)
        if guard_tail:
            # Only the padded tail of the last time block hits this; keep the
            # state frozen for t >= T so the final state matches step T-1.
            keep = (tb * tt + i) < t_valid
            pw = jnp.where(keep, pw_new, pw)
            v = jnp.where(keep, v_new, v)
            s = jnp.where(keep, spike, s)
        else:
            pw, v, s = pw_new, v_new, spike

    v_sc[...] = v
    pw_sc[...] = pw
    s_sc[...] = s
    v_out_ref[...] = v


# --------------------------------------------------------------------------
# Wrapper: pad/align, run GEMM + recurrence, unpad
# --------------------------------------------------------------------------
@jax.jit
def esnn_sequence(x_seq, weight, params, v0, psp0, s0):
    """Run T ESNN timesteps with hoisted projection + fused recurrence.

    x_seq : (T, B, I) input spikes
    weight: (N, I)    Linear weight (torch layout, no bias)
    params: (4,)      [alpha, beta, sigma, voltage_decay]
    v0    : (B, N), psp0: (B, I), s0: (B, N) initial state
    Returns (spikes (T, B, N) f32, v_final (B, N) f32, psp_final (B, I) f32).
    """
    T, B, I = x_seq.shape
    N = weight.shape[0]
    f32, bf16 = jnp.float32, jnp.bfloat16
    params = params.astype(f32)

    # Aligned sizes: batch padded to 16 sublanes (bf16 spike tiles), feature
    # dims to 128 lanes.  Zero padding is exact (padded rows contribute 0).
    Bp = _round_up(B, 16)
    Ip = _round_up(I, 128)
    Np = _round_up(N, 128)

    # v7x: split batch over a leading "parallel" grid axis (2 TensorCores)
    # when each half still holds a full bf16 sublane tile.  No-op otherwise.
    Bblk = Bp // 2 if Bp % 32 == 0 else Bp
    n_bb = Bp // Bblk

    # Time-axis blocking: amortize per-grid-step overhead while keeping the
    # double-buffered Y (f32) + spike (bf16) streams within ~8 MiB of VMEM.
    step_stream_bytes = Bblk * Np * (4 + 2)
    tt_cap = max(1, (8 * 1024 * 1024) // (2 * step_stream_bytes))
    tt_cap = int(min(T, 32, tt_cap))
    n_tb = -(-T // tt_cap)
    Tt = -(-T // n_tb)                      # balanced blocks -> minimal tail
    Tp = n_tb * Tt

    # ---- one-time host-side prep (jnp.pad, no full zero-init + scatter) ---
    x_p = jnp.pad(x_seq.astype(bf16),
                  ((0, Tp - T), (0, Bp - B), (0, Ip - I)))
    wt_p = jnp.pad(weight.astype(bf16).T, ((0, Ip - I), (0, Np - N)))
    v0_p = jnp.pad(v0.astype(f32), ((0, Bp - B), (0, Np - N)))
    s0_p = jnp.pad(s0.astype(f32), ((0, Bp - B), (0, Np - N)))
    # Projected initial psp state (tiny, once per sequence, f32 for accuracy).
    pw0 = jnp.dot(psp0.astype(f32), weight.astype(f32).T)
    pw0_p = jnp.pad(pw0, ((0, Bp - B), (0, Np - N)))

    # ---- phase 1: one big GEMM over all timesteps (full MXU occupancy) ----
    y = _project_inputs(x_p.reshape(Tp * Bp, Ip), wt_p).reshape(Tp, Bp, Np)

    # ---- phase 2: serial recurrence (element-wise only) --------------------
    kernel = functools.partial(_esnn_recurrence_kernel, tt=Tt, t_valid=T,
                               guard_tail=(Tp != T))
    spikes_p, v_p = pl.pallas_call(
        kernel,
        out_shape=(jax.ShapeDtypeStruct((Tp, Bp, Np), bf16),   # spike stream
                   jax.ShapeDtypeStruct((Bp, Np), f32)),        # final v
        grid=(n_bb, n_tb),                    # (parallel batch, serial time)
        in_specs=[
            pl.BlockSpec(memory_space=pltpu.MemorySpace.SMEM),       # scalars
            pl.BlockSpec((Tt, Bblk, Np), lambda b, t: (t, b, 0)),    # Y
            pl.BlockSpec((Bblk, Np), lambda b, t: (b, 0)),           # v0
            pl.BlockSpec((Bblk, Np), lambda b, t: (b, 0)),           # pspW0
            pl.BlockSpec((Bblk, Np), lambda b, t: (b, 0)),           # spike0
        ],
        out_specs=(
            pl.BlockSpec((Tt, Bblk, Np), lambda b, t: (t, b, 0)),    # spikes
            pl.BlockSpec((Bblk, Np), lambda b, t: (b, 0)),           # v final
        ),
        scratch_shapes=[pltpu.VMEM((Bblk, Np), f32),   # v state
                        pltpu.VMEM((Bblk, Np), f32),   # pspW state
                        pltpu.VMEM((Bblk, Np), f32)],  # prev-spike state
        input_output_aliases={2: 1},                   # v0 buffer -> v_final
        compiler_params=pltpu.CompilerParams(
            dimension_semantics=("parallel", "arbitrary"),
            vmem_limit_bytes=32 * 1024 * 1024),
    )(params, y, v0_p, pw0_p, s0_p)

    # ---- unprojected psp final state (closed form, off the kernel path) ---
    alpha, beta = params[0], params[1]
    decay = alpha ** jnp.arange(T - 1, -1, -1, dtype=f32)
    psp_final = (alpha ** T) * psp0.astype(f32) + beta * jnp.einsum(
        "t,tbi->bi", decay, x_seq.astype(f32))

    spikes = spikes_p[:T, :B, :N].astype(f32)
    return spikes, v_p[:B, :N], psp_final


class ESNN:
    """JAX/Pallas port of the PyTorch ESNN module (forward pass only)."""

    def __init__(self, input_size, neuron_number, batch_size=10,
                 voltage_lambda=0.2, alpha=0.9, beta=0.9, key=None):
        self.input_size = input_size
        self.neuron_number = neuron_number
        self.batch_size = batch_size
        self.alpha = float(alpha)
        self.beta = float(beta)
        self.sigma = 0.5
        self.voltage_decay = float(voltage_lambda)
        if key is None:
            key = jax.random.PRNGKey(0)
        bound = 1.0 / (input_size ** 0.5)     # torch.nn.Linear default init
        self.weight = jax.random.uniform(
            key, (neuron_number, input_size), jnp.float32, -bound, bound)
        self._params = jnp.array(
            [self.alpha, self.beta, self.sigma, self.voltage_decay],
            jnp.float32)

    def create_init_states(self, batch_size=None):
        if batch_size is None:
            batch_size = self.batch_size
        return {
            "v": jnp.zeros((batch_size, self.neuron_number), jnp.float32),
            "psp": jnp.zeros((batch_size, self.input_size), jnp.float32),
            "output": jnp.zeros((batch_size, self.neuron_number), jnp.float32),
        }

    def forward(self, current_spike, state_dict):
        """Single-step forward(), matching the PyTorch module API."""
        spikes, v, psp = esnn_sequence(
            current_spike[None], self.weight, self._params,
            state_dict["v"], state_dict["psp"], state_dict["output"])
        spike = spikes[0]
        new_state = {"v": v, "psp": psp, "output": spike}
        return spike, new_state

    __call__ = forward

    def forward_sequence(self, spike_seq, state_dict):
        """Run a whole (T, B, I) spike sequence through the fused kernels."""
        spikes, v, psp = esnn_sequence(
            spike_seq, self.weight, self._params,
            state_dict["v"], state_dict["psp"], state_dict["output"])
        new_state = {"v": v, "psp": psp, "output": spikes[-1]}
        return spikes, new_state


if __name__ == "__main__":
    B, I, N, T = 2, 16, 32, 8
    key = jax.random.PRNGKey(0)
    k_w, k_x = jax.random.split(key)

    model = ESNN(I, N, batch_size=B, key=k_w)
    x_seq = (jax.random.uniform(k_x, (T, B, I)) < 0.5).astype(jnp.float32)

    # Full-sequence fused path.
    spikes, final_state = model.forward_sequence(
        x_seq, model.create_init_states(B))
    # Single-step API (PyTorch-style forward()).
    spike1, state1 = model.forward(x_seq[0], model.create_init_states(B))
    jax.block_until_ready((spikes, final_state["v"], final_state["psp"],
                           spike1))

    assert spikes.shape == (T, B, N)
    assert final_state["v"].shape == (B, N)
    assert final_state["psp"].shape == (B, I)

    # Reference check in plain JAX (f32 weight). The kernel uses bf16 MXU
    # operands (intentional, per perf review), so voltages can differ by a
    # few 1e-2; spike feedback is teacher-forced with the kernel's spikes and
    # spike equality is only asserted away from the threshold boundary.
    alpha, beta, sigma, lam = (model.alpha, model.beta, model.sigma,
                               model.voltage_decay)
    v = jnp.zeros((B, N), jnp.float32)
    psp = jnp.zeros((B, I), jnp.float32)
    s_prev = jnp.zeros((B, N), jnp.float32)
    ok = True
    for t in range(T):
        psp = alpha * psp + beta * x_seq[t]
        v = lam * v + psp @ model.weight.T - sigma * s_prev
        ref_spike = (v > 1.0).astype(jnp.float32)
        robust = jnp.abs(v - 1.0) > 0.1
        ok &= bool(jnp.all(jnp.where(robust, spikes[t] == ref_spike, True)))
        s_prev = spikes[t]                      # teacher forcing
    assert ok, "spike mismatch vs reference"
    assert jnp.allclose(final_state["psp"], psp, atol=1e-4, rtol=1e-4)
    assert jnp.allclose(final_state["v"], v, atol=0.1, rtol=0.05)
    assert jnp.array_equal(spike1, spikes[0]), "single step != first seq step"

    print("KERNEL_OK")
</pallas_src>

<mosaic_0001>
module attributes {stable_mosaic.version = 11 : i64} {
  func.func @_matmul_kernel(%arg0: i32, %arg1: i32, %arg2: i32, %arg3: memref<128x128xbf16, #tpu.memory_space<vmem>>, %arg4: memref<128x128xbf16, #tpu.memory_space<vmem>>, %arg5: memref<128x128xf32, #tpu.memory_space<vmem>>, %arg6: memref<128x128xf32, #tpu.memory_space<vmem>>) attributes {dimension_semantics = [#tpu.dimension_semantics<parallel>, #tpu.dimension_semantics<parallel>, #tpu.dimension_semantics<arbitrary>], iteration_bounds = array<i64: 1, 1, 1>, scalar_prefetch = 0 : i64, scratch_operands = 1 : i64, tpu.core_type = #tpu.core_type<tc>, window_params = [{transform_indices = @transform_0, window_bounds = array<i64: 128, 128>}, {transform_indices = @transform_1, window_bounds = array<i64: 128, 128>}, {transform_indices = @transform_2, window_bounds = array<i64: 128, 128>}]} {
    %c0_i32 = arith.constant 0 : i32
    %0 = arith.cmpi eq, %arg2, %c0_i32 : i32
    %1 = arith.extui %0 : i1 to i32
    %c0_i32_0 = arith.constant 0 : i32
    %2 = arith.cmpi ne, %1, %c0_i32_0 : i32
    scf.if %2 {
      %cst_10 = arith.constant 0.000000e+00 : f32
      %12 = vector.broadcast %cst_10 : f32 to vector<128x128xf32>
      %c0_11 = arith.constant 0 : index
      %c0_12 = arith.constant 0 : index
      %13 = vector.load %arg6[%c0_11, %c0_12] : memref<128x128xf32, #tpu.memory_space<vmem>>, vector<128x128xf32>
      tpu.vector_store %arg6[%c0_11, %c0_12], %12 {strides = array<i32>} : memref<128x128xf32, #tpu.memory_space<vmem>>, vector<128x128xf32>,
    } else {
    }
    %c0 = arith.constant 0 : index
    %c0_1 = arith.constant 0 : index
    %3 = vector.load %arg6[%c0, %c0_1] : memref<128x128xf32, #tpu.memory_space<vmem>>, vector<128x128xf32>
    %c0_2 = arith.constant 0 : index
    %c0_3 = arith.constant 0 : index
    %4 = vector.load %arg3[%c0_2, %c0_3] : memref<128x128xbf16, #tpu.memory_space<vmem>>, vector<128x128xbf16>
    %c0_4 = arith.constant 0 : index
    %c0_5 = arith.constant 0 : index
    %5 = vector.load %arg4[%c0_4, %c0_5] : memref<128x128xbf16, #tpu.memory_space<vmem>>, vector<128x128xbf16>
    %cst = arith.constant dense<0.000000e+00> : vector<128x128xf32>
    %6 = tpu.matmul %4, %5, %cst {dimension_numbers = #tpu.dot_dimension_numbers<[1], [0], [0], [1], [0, 0, 1, 1], [], []>} : vector<128x128xbf16>, vector<128x128xbf16>, vector<128x128xf32> -> vector<128x128xf32>
    %7 = arith.addf %3, %6 : vector<128x128xf32>
    %c0_6 = arith.constant 0 : index
    %c0_7 = arith.constant 0 : index
    %8 = vector.load %arg6[%c0_6, %c0_7] : memref<128x128xf32, #tpu.memory_space<vmem>>, vector<128x128xf32>
    tpu.vector_store %arg6[%c0_6, %c0_7], %7 {strides = array<i32>} : memref<128x128xf32, #tpu.memory_space<vmem>>, vector<128x128xf32>,
    %c0_i32_8 = arith.constant 0 : i32
    %9 = arith.cmpi eq, %arg2, %c0_i32_8 : i32
    %10 = arith.extui %9 : i1 to i32
    %c0_i32_9 = arith.constant 0 : i32
    %11 = arith.cmpi ne, %10, %c0_i32_9 : i32
    scf.if %11 {
      %c0_10 = arith.constant 0 : index
      %c0_11 = arith.constant 0 : index
      %12 = vector.load %arg6[%c0_10, %c0_11] : memref<128x128xf32, #tpu.memory_space<vmem>>, vector<128x128xf32>
      %c0_12 = arith.constant 0 : index
      %c0_13 = arith.constant 0 : index
      %13 = vector.load %arg5[%c0_12, %c0_13] : memref<128x128xf32, #tpu.memory_space<vmem>>, vector<128x128xf32>
      tpu.vector_store %arg5[%c0_12, %c0_13], %12 {strides = array<i32>} : memref<128x128xf32, #tpu.memory_space<vmem>>, vector<128x128xf32>,
    } else {
    }
    return
  }
  func.func @transform_0(%arg0: i32, %arg1: i32, %arg2: i32) -> (i32, i32) {
    %c0_i32 = arith.constant 0 : i32
    return %arg0, %arg2 : i32, i32
  }
  func.func @transform_1(%arg0: i32, %arg1: i32, %arg2: i32) -> (i32, i32) {
    %c0_i32 = arith.constant 0 : i32
    return %arg2, %arg1 : i32, i32
  }
  func.func @transform_2(%arg0: i32, %arg1: i32, %arg2: i32) -> (i32, i32) {
    %c0_i32 = arith.constant 0 : i32
    return %arg0, %arg1 : i32, i32
  }
}

module attributes {stable_mosaic.version = 11 : i64} {
  func.func @_esnn_recurrence_kernel(%arg0: i32, %arg1: i32, %arg2: memref<4xf32, #tpu.memory_space<smem>>, %arg3: memref<8x16x128xf32, #tpu.memory_space<vmem>>, %arg4: memref<16x128xf32, #tpu.memory_space<vmem>>, %arg5: memref<16x128xf32, #tpu.memory_space<vmem>>, %arg6: memref<16x128xf32, #tpu.memory_space<vmem>>, %arg7: memref<8x16x128xbf16, #tpu.memory_space<vmem>>, %arg8: memref<16x128xf32, #tpu.memory_space<vmem>>, %arg9: memref<16x128xf32, #tpu.memory_space<vmem>>, %arg10: memref<16x128xf32, #tpu.memory_space<vmem>>, %arg11: memref<16x128xf32, #tpu.memory_space<vmem>>) attributes {dimension_semantics = [#tpu.dimension_semantics<parallel>, #tpu.dimension_semantics<arbitrary>], iteration_bounds = array<i64: 1, 1>, scalar_prefetch = 0 : i64, scratch_operands = 3 : i64, tpu.core_type = #tpu.core_type<tc>, window_params = [{transform_indices = @transform_0, window_bounds = array<i64: 4>}, {transform_indices = @transform_1, window_bounds = array<i64: 8, 16, 128>}, {transform_indices = @transform_2, window_bounds = array<i64: 16, 128>}, {transform_indices = @transform_3, window_bounds = array<i64: 16, 128>}, {transform_indices = @transform_4, window_bounds = array<i64: 16, 128>}, {transform_indices = @transform_5, window_bounds = array<i64: 8, 16, 128>}, {transform_indices = @transform_6, window_bounds = array<i64: 16, 128>}]} {
    %c0_i32 = arith.constant 0 : i32
    %0 = arith.cmpi eq, %arg1, %c0_i32 : i32
    %1 = arith.extui %0 : i1 to i32
    %c0_i32_0 = arith.constant 0 : i32
    %2 = arith.cmpi ne, %1, %c0_i32_0 : i32
    scf.if %2 {
      %c0_66 = arith.constant 0 : index
      %c0_67 = arith.constant 0 : index
      %182 = vector.load %arg4[%c0_66, %c0_67] : memref<16x128xf32, #tpu.memory_space<vmem>>, vector<16x128xf32>
      %c0_68 = arith.constant 0 : index
      %c0_69 = arith.constant 0 : index
      %183 = vector.load %arg9[%c0_68, %c0_69] : memref<16x128xf32, #tpu.memory_space<vmem>>, vector<16x128xf32>
      tpu.vector_store %arg9[%c0_68, %c0_69], %182 {strides = array<i32>} : memref<16x128xf32, #tpu.memory_space<vmem>>, vector<16x128xf32>,
      %c0_70 = arith.constant 0 : index
      %c0_71 = arith.constant 0 : index
      %184 = vector.load %arg5[%c0_70, %c0_71] : memref<16x128xf32, #tpu.memory_space<vmem>>, vector<16x128xf32>
      %c0_72 = arith.constant 0 : index
      %c0_73 = arith.constant 0 : index
      %185 = vector.load %arg10[%c0_72, %c0_73] : memref<16x128xf32, #tpu.memory_space<vmem>>, vector<16x128xf32>
      tpu.vector_store %arg10[%c0_72, %c0_73], %184 {strides = array<i32>} : memref<16x128xf32, #tpu.memory_space<vmem>>, vector<16x128xf32>,
      %c0_74 = arith.constant 0 : index
      %c0_75 = arith.constant 0 : index
      %186 = vector.load %arg6[%c0_74, %c0_75] : memref<16x128xf32, #tpu.memory_space<vmem>>, vector<16x128xf32>
      %c0_76 = arith.constant 0 : index
      %c0_77 = arith.constant 0 : index
      %187 = vector.load %arg11[%c0_76, %c0_77] : memref<16x128xf32, #tpu.memory_space<vmem>>, vector<16x128xf32>
      tpu.vector_store %arg11[%c0_76, %c0_77], %186 {strides = array<i32>} : memref<16x128xf32, #tpu.memory_space<vmem>>, vector<16x128xf32>,
    } else {
    }
    %c0 = arith.constant 0 : index
    %3 = memref.load %arg2[%c0] : memref<4xf32, #tpu.memory_space<smem>>
    %c1 = arith.constant 1 : index
    %4 = memref.load %arg2[%c1] : memref<4xf32, #tpu.memory_space<smem>>
    %c2 = arith.constant 2 : index
    %5 = memref.load %arg2[%c2] : memref<4xf32, #tpu.memory_space<smem>>
    %c3 = arith.constant 3 : index
    %6 = memref.load %arg2[%c3] : memref<4xf32, #tpu.memory_space<smem>>
    %c0_1 = arith.constant 0 : index
    %c0_2 = arith.constant 0 : index
    %7 = vector.load %arg9[%c0_1, %c0_2] : memref<16x128xf32, #tpu.memory_space<vmem>>, vector<16x128xf32>
    %c0_3 = arith.constant 0 : index
    %c0_4 = arith.constant 0 : index
    %8 = vector.load %arg10[%c0_3, %c0_4] : memref<16x128xf32, #tpu.memory_space<vmem>>, vector<16x128xf32>
    %c0_5 = arith.constant 0 : index
    %c0_6 = arith.constant 0 : index
    %9 = vector.load %arg11[%c0_5, %c0_6] : memref<16x128xf32, #tpu.memory_space<vmem>>, vector<16x128xf32>
    %10 = vector.broadcast %3 : f32 to vector<16x128xf32>
    %11 = arith.mulf %10, %8 : vector<16x128xf32>
    %c0_7 = arith.constant 0 : index
    %c0_8 = arith.constant 0 : index
    %c0_9 = arith.constant 0 : index
    %12 = vector.load %arg3[%c0_7, %c0_8, %c0_9] : memref<8x16x128xf32, #tpu.memory_space<vmem>>, vector<1x16x128xf32>
    %13 = vector.shape_cast %12 : vector<1x16x128xf32> to vector<16x128xf32>
    %14 = vector.broadcast %4 : f32 to vector<16x128xf32>
    %15 = arith.mulf %14, %13 : vector<16x128xf32>
    %16 = arith.addf %11, %15 : vector<16x128xf32>
    %17 = vector.broadcast %6 : f32 to vector<16x128xf32>
    %18 = arith.mulf %17, %7 : vector<16x128xf32>
    %19 = arith.addf %18, %16 : vector<16x128xf32>
    %20 = vector.broadcast %5 : f32 to vector<16x128xf32>
    %21 = arith.mulf %20, %9 : vector<16x128xf32>
    %22 = arith.subf %19, %21 : vector<16x128xf32>
    %cst = arith.constant 1.000000e+00 : f32
    %23 = vector.broadcast %cst : f32 to vector<16x128xf32>
    %24 = arith.cmpf ogt, %22, %23 : vector<16x128xf32>
    %25 = arith.extui %24 : vector<16x128xi1> to vector<16x128xi32>
    %26 = arith.sitofp %25 : vector<16x128xi32> to vector<16x128xf32>
    %27 = arith.truncf %26 : vector<16x128xf32> to vector<16x128xbf16>
    %c0_10 = arith.constant 0 : index
    %c0_11 = arith.constant 0 : index
    %c0_12 = arith.constant 0 : index
    %28 = vector.load %arg7[%c0_10, %c0_11, %c0_12] : memref<8x16x128xbf16, #tpu.memory_space<vmem>>, vector<1x16x128xbf16>
    %29 = vector.shape_cast %28 : vector<1x16x128xbf16> to vector<16x128xbf16>
    %30 = vector.shape_cast %27 : vector<16x128xbf16> to vector<1x16x128xbf16>
    tpu.vector_store %arg7[%c0_10, %c0_11, %c0_12], %30 {strides = array<i32>} : memref<8x16x128xbf16, #tpu.memory_space<vmem>>, vector<1x16x128xbf16>,
    %31 = vector.broadcast %3 : f32 to vector<16x128xf32>
    %32 = arith.mulf %31, %16 : vector<16x128xf32>
    %c1_13 = arith.constant 1 : index
    %c0_14 = arith.constant 0 : index
    %c0_15 = arith.constant 0 : index
    %33 = vector.load %arg3[%c1_13, %c0_14, %c0_15] : memref<8x16x128xf32, #tpu.memory_space<vmem>>, vector<1x16x128xf32>
    %34 = vector.shape_cast %33 : vector<1x16x128xf32> to vector<16x128xf32>
    %35 = vector.broadcast %4 : f32 to vector<16x128xf32>
    %36 = arith.mulf %35, %34 : vector<16x128xf32>
    %37 = arith.addf %32, %36 : vector<16x128xf32>
    %38 = vector.broadcast %6 : f32 to vector<16x128xf32>
    %39 = arith.mulf %38, %22 : vector<16x128xf32>
    %40 = arith.addf %39, %37 : vector<16x128xf32>
    %41 = vector.broadcast %5 : f32 to vector<16x128xf32>
    %42 = arith.mulf %41, %26 : vector<16x128xf32>
    %43 = arith.subf %40, %42 : vector<16x128xf32>
    %cst_16 = arith.constant 1.000000e+00 : f32
    %44 = vector.broadcast %cst_16 : f32 to vector<16x128xf32>
    %45 = arith.cmpf ogt, %43, %44 : vector<16x128xf32>
    %46 = arith.extui %45 : vector<16x128xi1> to vector<16x128xi32>
    %47 = arith.sitofp %46 : vector<16x128xi32> to vector<16x128xf32>
    %48 = arith.truncf %47 : vector<16x128xf32> to vector<16x128xbf16>
    %c1_17 = arith.constant 1 : index
    %c0_18 = arith.constant 0 : index
    %c0_19 = arith.constant 0 : index
    %49 = vector.load %arg7[%c1_17, %c0_18, %c0_19] : memref<8x16x128xbf16, #tpu.memory_space<vmem>>, vector<1x16x128xbf16>
    %50 = vector.shape_cast %49 : vector<1x16x128xbf16> to vector<16x128xbf16>
    %51 = vector.shape_cast %48 : vector<16x128xbf16> to vector<1x16x128xbf16>
    tpu.vector_store %arg7[%c1_17, %c0_18, %c0_19], %51 {strides = array<i32>} : memref<8x16x128xbf16, #tpu.memory_space<vmem>>, vector<1x16x128xbf16>,
    %52 = vector.broadcast %3 : f32 to vector<16x128xf32>
    %53 = arith.mulf %52, %37 : vector<16x128xf32>
    %c2_20 = arith.constant 2 : index
    %c0_21 = arith.constant 0 : index
    %c0_22 = arith.constant 0 : index
    %54 = vector.load %arg3[%c2_20, %c0_21, %c0_22] : memref<8x16x128xf32, #tpu.memory_space<vmem>>, vector<1x16x128xf32>
    %55 = vector.shape_cast %54 : vector<1x16x128xf32> to vector<16x128xf32>
    %56 = vector.broadcast %4 : f32 to vector<16x128xf32>
    %57 = arith.mulf %56, %55 : vector<16x128xf32>
    %58 = arith.addf %53, %57 : vector<16x128xf32>
    %59 = vector.broadcast %6 : f32 to vector<16x128xf32>
    %60 = arith.mulf %59, %43 : vector<16x128xf32>
    %61 = arith.addf %60, %58 : vector<16x128xf32>
    %62 = vector.broadcast %5 : f32 to vector<16x128xf32>
    %63 = arith.mulf %62, %47 : vector<16x128xf32>
    %64 = arith.subf %61, %63 : vector<16x128xf32>
    %cst_23 = arith.constant 1.000000e+00 : f32
    %65 = vector.broadcast %cst_23 : f32 to vector<16x128xf32>
    %66 = arith.cmpf ogt, %64, %65 : vector<16x128xf32>
    %67 = arith.extui %66 : vector<16x128xi1> to vector<16x128xi32>
    %68 = arith.sitofp %67 : vector<16x128xi32> to vector<16x128xf32>
    %69 = arith.truncf %68 : vector<16x128xf32> to vector<16x128xbf16>
    %c2_24 = arith.constant 2 : index
    %c0_25 = arith.constant 0 : index
    %c0_26 = arith.constant 0 : index
    %70 = vector.load %arg7[%c2_24, %c0_25, %c0_26] : memref<8x16x128xbf16, #tpu.memory_space<vmem>>, vector<1x16x128xbf16>
    %71 = vector.shape_cast %70 : vector<1x16x128xbf16> to vector<16x128xbf16>
    %72 = vector.shape_cast %69 : vector<16x128xbf16> to vector<1x16x128xbf16>
    tpu.vector_store %arg7[%c2_24, %c0_25, %c0_26], %72 {strides = array<i32>} : memref<8x16x128xbf16, #tpu.memory_space<vmem>>, vector<1x16x128xbf16>,
    %73 = vector.broadcast %3 : f32 to vector<16x128xf32>
    %74 = arith.mulf %73, %58 : vector<16x128xf32>
    %c3_27 = arith.constant 3 : index
    %c0_28 = arith.constant 0 : index
    %c0_29 = arith.constant 0 : index
    %75 = vector.load %arg3[%c3_27, %c0_28, %c0_29] : memref<8x16x128xf32, #tpu.memory_space<vmem>>, vector<1x16x128xf32>
    %76 = vector.shape_cast %75 : vector<1x16x128xf32> to vector<16x128xf32>
    %77 = vector.broadcast %4 : f32 to vector<16x128xf32>
    %78 = arith.mulf %77, %76 : vector<16x128xf32>
    %79 = arith.addf %74, %78 : vector<16x128xf32>
    %80 = vector.broadcast %6 : f32 to vector<16x128xf32>
    %81 = arith.mulf %80, %64 : vector<16x128xf32>
    %82 = arith.addf %81, %79 : vector<16x128xf32>
    %83 = vector.broadcast %5 : f32 to vector<16x128xf32>
    %84 = arith.mulf %83, %68 : vector<16x128xf32>
    %85 = arith.subf %82, %84 : vector<16x128xf32>
    %cst_30 = arith.constant 1.000000e+00 : f32
    %86 = vector.broadcast %cst_30 : f32 to vector<16x128xf32>
    %87 = arith.cmpf ogt, %85, %86 : vector<16x128xf32>
    %88 = arith.extui %87 : vector<16x128xi1> to vector<16x128xi32>
    %89 = arith.sitofp %88 : vector<16x128xi32> to vector<16x128xf32>
    %90 = arith.truncf %89 : vector<16x128xf32> to vector<16x128xbf16>
    %c3_31 = arith.constant 3 : index
    %c0_32 = arith.constant 0 : index
    %c0_33 = arith.constant 0 : index
    %91 = vector.load %arg7[%c3_31, %c0_32, %c0_33] : memref<8x16x128xbf16, #tpu.memory_space<vmem>>, vector<1x16x128xbf16>
    %92 = vector.shape_cast %91 : vector<1x16x128xbf16> to vector<16x128xbf16>
    %93 = vector.shape_cast %90 : vector<16x128xbf16> to vector<1x16x128xbf16>
    tpu.vector_store %arg7[%c3_31, %c0_32, %c0_33], %93 {strides = array<i32>} : memref<8x16x128xbf16, #tpu.memory_space<vmem>>, vector<1x16x128xbf16>,
    %94 = vector.broadcast %3 : f32 to vector<16x128xf32>
    %95 = arith.mulf %94, %79 : vector<16x128xf32>
    %c4 = arith.constant 4 : index
    %c0_34 = arith.constant 0 : index
    %c0_35 = arith.constant 0 : index
    %96 = vector.load %arg3[%c4, %c0_34, %c0_35] : memref<8x16x128xf32, #tpu.memory_space<vmem>>, vector<1x16x128xf32>
    %97 = vector.shape_cast %96 : vector<1x16x128xf32> to vector<16x128xf32>
    %98 = vector.broadcast %4 : f32 to vector<16x128xf32>
    %99 = arith.mulf %98, %97 : vector<16x128xf32>
    %100 = arith.addf %95, %99 : vector<16x128xf32>
    %101 = vector.broadcast %6 : f32 to vector<16x128xf32>
    %102 = arith.mulf %101, %85 : vector<16x128xf32>
    %103 = arith.addf %102, %100 : vector<16x128xf32>
    %104 = vector.broadcast %5 : f32 to vector<16x128xf32>
    %105 = arith.mulf %104, %89 : vector<16x128xf32>
    %106 = arith.subf %103, %105 : vector<16x128xf32>
    %cst_36 = arith.constant 1.000000e+00 : f32
    %107 = vector.broadcast %cst_36 : f32 to vector<16x128xf32>
    %108 = arith.cmpf ogt, %106, %107 : vector<16x128xf32>
    %109 = arith.extui %108 : vector<16x128xi1> to vector<16x128xi32>
    %110 = arith.sitofp %109 : vector<16x128xi32> to vector<16x128xf32>
    %111 = arith.truncf %110 : vector<16x128xf32> to vector<16x128xbf16>
    %c4_37 = arith.constant 4 : index
    %c0_38 = arith.constant 0 : index
    %c0_39 = arith.constant 0 : index
    %112 = vector.load %arg7[%c4_37, %c0_38, %c0_39] : memref<8x16x128xbf16, #tpu.memory_space<vmem>>, vector<1x16x128xbf16>
    %113 = vector.shape_cast %112 : vector<1x16x128xbf16> to vector<16x128xbf16>
    %114 = vector.shape_cast %111 : vector<16x128xbf16> to vector<1x16x128xbf16>
    tpu.vector_store %arg7[%c4_37, %c0_38, %c0_39], %114 {strides = array<i32>} : memref<8x16x128xbf16, #tpu.memory_space<vmem>>, vector<1x16x128xbf16>,
    %115 = vector.broadcast %3 : f32 to vector<16x128xf32>
    %116 = arith.mulf %115, %100 : vector<16x128xf32>
    %c5 = arith.constant 5 : index
    %c0_40 = arith.constant 0 : index
    %c0_41 = arith.constant 0 : index
    %117 = vector.load %arg3[%c5, %c0_40, %c0_41] : memref<8x16x128xf32, #tpu.memory_space<vmem>>, vector<1x16x128xf32>
    %118 = vector.shape_cast %117 : vector<1x16x128xf32> to vector<16x128xf32>
    %119 = vector.broadcast %4 : f32 to vector<16x128xf32>
    %120 = arith.mulf %119, %118 : vector<16x128xf32>
    %121 = arith.addf %116, %120 : vector<16x128xf32>
    %122 = vector.broadcast %6 : f32 to vector<16x128xf32>
    %123 = arith.mulf %122, %106 : vector<16x128xf32>
    %124 = arith.addf %123, %121 : vector<16x128xf32>
    %125 = vector.broadcast %5 : f32 to vector<16x128xf32>
    %126 = arith.mulf %125, %110 : vector<16x128xf32>
    %127 = arith.subf %124, %126 : vector<16x128xf32>
    %cst_42 = arith.constant 1.000000e+00 : f32
    %128 = vector.broadcast %cst_42 : f32 to vector<16x128xf32>
    %129 = arith.cmpf ogt, %127, %128 : vector<16x128xf32>
    %130 = arith.extui %129 : vector<16x128xi1> to vector<16x128xi32>
    %131 = arith.sitofp %130 : vector<16x128xi32> to vector<16x128xf32>
    %132 = arith.truncf %131 : vector<16x128xf32> to vector<16x128xbf16>
    %c5_43 = arith.constant 5 : index
    %c0_44 = arith.constant 0 : index
    %c0_45 = arith.constant 0 : index
    %133 = vector.load %arg7[%c5_43, %c0_44, %c0_45] : memref<8x16x128xbf16, #tpu.memory_space<vmem>>, vector<1x16x128xbf16>
    %134 = vector.shape_cast %133 : vector<1x16x128xbf16> to vector<16x128xbf16>
    %135 = vector.shape_cast %132 : vector<16x128xbf16> to vector<1x16x128xbf16>
    tpu.vector_store %arg7[%c5_43, %c0_44, %c0_45], %135 {strides = array<i32>} : memref<8x16x128xbf16, #tpu.memory_space<vmem>>, vector<1x16x128xbf16>,
    %136 = vector.broadcast %3 : f32 to vector<16x128xf32>
    %137 = arith.mulf %136, %121 : vector<16x128xf32>
    %c6 = arith.constant 6 : index
    %c0_46 = arith.constant 0 : index
    %c0_47 = arith.constant 0 : index
    %138 = vector.load %arg3[%c6, %c0_46, %c0_47] : memref<8x16x128xf32, #tpu.memory_space<vmem>>, vector<1x16x128xf32>
    %139 = vector.shape_cast %138 : vector<1x16x128xf32> to vector<16x128xf32>
    %140 = vector.broadcast %4 : f32 to vector<16x128xf32>
    %141 = arith.mulf %140, %139 : vector<16x128xf32>
    %142 = arith.addf %137, %141 : vector<16x128xf32>
    %143 = vector.broadcast %6 : f32 to vector<16x128xf32>
    %144 = arith.mulf %143, %127 : vector<16x128xf32>
    %145 = arith.addf %144, %142 : vector<16x128xf32>
    %146 = vector.broadcast %5 : f32 to vector<16x128xf32>
    %147 = arith.mulf %146, %131 : vector<16x128xf32>
    %148 = arith.subf %145, %147 : vector<16x128xf32>
    %cst_48 = arith.constant 1.000000e+00 : f32
    %149 = vector.broadcast %cst_48 : f32 to vector<16x128xf32>
    %150 = arith.cmpf ogt, %148, %149 : vector<16x128xf32>
    %151 = arith.extui %150 : vector<16x128xi1> to vector<16x128xi32>
    %152 = arith.sitofp %151 : vector<16x128xi32> to vector<16x128xf32>
    %153 = arith.truncf %152 : vector<16x128xf32> to vector<16x128xbf16>
    %c6_49 = arith.constant 6 : index
    %c0_50 = arith.constant 0 : index
    %c0_51 = arith.constant 0 : index
    %154 = vector.load %arg7[%c6_49, %c0_50, %c0_51] : memref<8x16x128xbf16, #tpu.memory_space<vmem>>, vector<1x16x128xbf16>
    %155 = vector.shape_cast %154 : vector<1x16x128xbf16> to vector<16x128xbf16>
    %156 = vector.shape_cast %153 : vector<16x128xbf16> to vector<1x16x128xbf16>
    tpu.vector_store %arg7[%c6_49, %c0_50, %c0_51], %156 {strides = array<i32>} : memref<8x16x128xbf16, #tpu.memory_space<vmem>>, vector<1x16x128xbf16>,
    %157 = vector.broadcast %3 : f32 to vector<16x128xf32>
    %158 = arith.mulf %157, %142 : vector<16x128xf32>
    %c7 = arith.constant 7 : index
    %c0_52 = arith.constant 0 : index
    %c0_53 = arith.constant 0 : index
    %159 = vector.load %arg3[%c7, %c0_52, %c0_53] : memref<8x16x128xf32, #tpu.memory_space<vmem>>, vector<1x16x128xf32>
    %160 = vector.shape_cast %159 : vector<1x16x128xf32> to vector<16x128xf32>
    %161 = vector.broadcast %4 : f32 to vector<16x128xf32>
    %162 = arith.mulf %161, %160 : vector<16x128xf32>
    %163 = arith.addf %158, %162 : vector<16x128xf32>
    %164 = vector.broadcast %6 : f32 to vector<16x128xf32>
    %165 = arith.mulf %164, %148 : vector<16x128xf32>
    %166 = arith.addf %165, %163 : vector<16x128xf32>
    %167 = vector.broadcast %5 : f32 to vector<16x128xf32>
    %168 = arith.mulf %167, %152 : vector<16x128xf32>
    %169 = arith.subf %166, %168 : vector<16x128xf32>
    %cst_54 = arith.constant 1.000000e+00 : f32
    %170 = vector.broadcast %cst_54 : f32 to vector<16x128xf32>
    %171 = arith.cmpf ogt, %169, %170 : vector<16x128xf32>
    %172 = arith.extui %171 : vector<16x128xi1> to vector<16x128xi32>
    %173 = arith.sitofp %172 : vector<16x128xi32> to vector<16x128xf32>
    %174 = arith.truncf %173 : vector<16x128xf32> to vector<16x128xbf16>
    %c7_55 = arith.constant 7 : index
    %c0_56 = arith.constant 0 : index
    %c0_57 = arith.constant 0 : index
    %175 = vector.load %arg7[%c7_55, %c0_56, %c0_57] : memref<8x16x128xbf16, #tpu.memory_space<vmem>>, vector<1x16x128xbf16>
    %176 = vector.shape_cast %175 : vector<1x16x128xbf16> to vector<16x128xbf16>
    %177 = vector.shape_cast %174 : vector<16x128xbf16> to vector<1x16x128xbf16>
    tpu.vector_store %arg7[%c7_55, %c0_56, %c0_57], %177 {strides = array<i32>} : memref<8x16x128xbf16, #tpu.memory_space<vmem>>, vector<1x16x128xbf16>,
    %c0_58 = arith.constant 0 : index
    %c0_59 = arith.constant 0 : index
    %178 = vector.load %arg9[%c0_58, %c0_59] : memref<16x128xf32, #tpu.memory_space<vmem>>, vector<16x128xf32>
    tpu.vector_store %arg9[%c0_58, %c0_59], %169 {strides = array<i32>} : memref<16x128xf32, #tpu.memory_space<vmem>>, vector<16x128xf32>,
    %c0_60 = arith.constant 0 : index
    %c0_61 = arith.constant 0 : index
    %179 = vector.load %arg10[%c0_60, %c0_61] : memref<16x128xf32, #tpu.memory_space<vmem>>, vector<16x128xf32>
    tpu.vector_store %arg10[%c0_60, %c0_61], %163 {strides = array<i32>} : memref<16x128xf32, #tpu.memory_space<vmem>>, vector<16x128xf32>,
    %c0_62 = arith.constant 0 : index
    %c0_63 = arith.constant 0 : index
    %180 = vector.load %arg11[%c0_62, %c0_63] : memref<16x128xf32, #tpu.memory_space<vmem>>, vector<16x128xf32>
    tpu.vector_store %arg11[%c0_62, %c0_63], %173 {strides = array<i32>} : memref<16x128xf32, #tpu.memory_space<vmem>>, vector<16x128xf32>,
    %c0_64 = arith.constant 0 : index
    %c0_65 = arith.constant 0 : index
    %181 = vector.load %arg8[%c0_64, %c0_65] : memref<16x128xf32, #tpu.memory_space<vmem>>, vector<16x128xf32>
    tpu.vector_store %arg8[%c0_64, %c0_65], %169 {strides = array<i32>} : memref<16x128xf32, #tpu.memory_space<vmem>>, vector<16x128xf32>,
    return
  }
  func.func @transform_0(%arg0: i32, %arg1: i32) -> i32 {
    %c0_i32 = arith.constant 0 : i32
    %c0_i32_0 = arith.constant 0 : i32
    return %c0_i32 : i32
  }
  func.func @transform_1(%arg0: i32, %arg1: i32) -> (i32, i32, i32) {
    %c0_i32 = arith.constant 0 : i32
    %c0_i32_0 = arith.constant 0 : i32
    return %arg1, %arg0, %c0_i32 : i32, i32, i32
  }
  func.func @transform_2(%arg0: i32, %arg1: i32) -> (i32, i32) {
    %c0_i32 = arith.constant 0 : i32
    %c0_i32_0 = arith.constant 0 : i32
    return %arg0, %c0_i32 : i32, i32
  }
  func.func @transform_3(%arg0: i32, %arg1: i32) -> (i32, i32) {
    %c0_i32 = arith.constant 0 : i32
    %c0_i32_0 = arith.constant 0 : i32
    return %arg0, %c0_i32 : i32, i32
  }
  func.func @transform_4(%arg0: i32, %arg1: i32) -> (i32, i32) {
    %c0_i32 = arith.constant 0 : i32
    %c0_i32_0 = arith.constant 0 : i32
    return %arg0, %c0_i32 : i32, i32
  }
  func.func @transform_5(%arg0: i32, %arg1: i32) -> (i32, i32, i32) {
    %c0_i32 = arith.constant 0 : i32
    %c0_i32_0 = arith.constant 0 : i32
    return %arg1, %arg0, %c0_i32 : i32, i32, i32
  }
  func.func @transform_6(%arg0: i32, %arg1: i32) -> (i32, i32) {
    %c0_i32 = arith.constant 0 : i32
    %c0_i32_0 = arith.constant 0 : i32
    return %arg0, %c0_i32 : i32, i32
  }
}

</mosaic_0001>

<llo_original>
// kernel: esnn_sequence.2
$region0: #{esnn_sequence.2}
  #allocation0 [shape = 'u32[]', space=smem, size = 0x4, offset = 0x4, fixed_abs, tag = 'smem constant byte address 0x4 - core index']
  #allocation1 [shape = 'u32[144,128]{1,0:T(1,128)}', space=vmem, size = 0x12000, scoped, tag = 'internal scratch']
  #allocation2 [shape = 'f32[128,128]{1,0:T(8,128)}', space=vmem, size = 0x10000, scoped, tag = 'scratch operand']
  %s0 = inlined_call_operand.vmem [shape: bf16[128,128], index: 0, kind: input, shape index: {}]
  %s1 = inlined_call_operand.vmem [shape: bf16[128,128], index: 1, kind: input, shape index: {}]
  %s2 = inlined_call_operand.vmem [shape: f32[128,128], index: 2, kind: output, shape index: {}]
  %s3 = sld [smem:[#allocation0]]
  $region26: #{esnn_sequence.2} parent=0
    _
  %s5 = ssub.s32 1, %s3
  %s6 = scalar_select 0, %s5, %s3
  // Predicated region
  $region2: #{esnn_sequence.2} parent=0 // pred_check
    _
  $region3: #{esnn_sequence.2} parent=0 // pred_check_branch
    %8 = sbr.rel (0) target = $region5
  $region4: #{esnn_sequence.2} parent=0 // pred_region
    _
  $region5: #{esnn_sequence.2} parent=0 // pred_fallthru
    _
  // Predicated region
  $region6: #{esnn_sequence.2} parent=0 // pred_check
    _
  $region7: #{esnn_sequence.2} parent=0 // pred_check_branch
    %10 = sbr.rel (0) target = $region9
  $region8: #{esnn_sequence.2} parent=0 // pred_region
    _
  $region9: #{esnn_sequence.2} parent=0 // pred_fallthru
    _
  %p12 = scmp.eq.s32.totalorder 0, 0
  // Predicated region
  $region10: #{esnn_sequence.2} parent=0 // pred_check
    %p13 = pneg %p12
  $region11: #{esnn_sequence.2} parent=0 // pred_check_branch
    %15 = sbr.rel (%p13) target = $region13
  $region12: #{esnn_sequence.2} parent=0 // pred_region
    %16 = vst [vmem:[#allocation2] sm:$0xff] 0.0
    %17 = vst [vmem:[#allocation2 + $0x8] sm:$0xff] 0.0
    %18 = vst [vmem:[#allocation2 + $0x10] sm:$0xff] 0.0
    %19 = vst [vmem:[#allocation2 + $0x18] sm:$0xff] 0.0
    %20 = vst [vmem:[#allocation2 + $0x20] sm:$0xff] 0.0
    %21 = vst [vmem:[#allocation2 + $0x28] sm:$0xff] 0.0
    %22 = vst [vmem:[#allocation2 + $0x30] sm:$0xff] 0.0
    %23 = vst [vmem:[#allocation2 + $0x38] sm:$0xff] 0.0
    %24 = vst [vmem:[#allocation2 + $0x40] sm:$0xff] 0.0
    %25 = vst [vmem:[#allocation2 + $0x48] sm:$0xff] 0.0
    %26 = vst [vmem:[#allocation2 + $0x50] sm:$0xff] 0.0
    %27 = vst [vmem:[#allocation2 + $0x58] sm:$0xff] 0.0
    %28 = vst [vmem:[#allocation2 + $0x60] sm:$0xff] 0.0
    %29 = vst [vmem:[#allocation2 + $0x68] sm:$0xff] 0.0
    %30 = vst [vmem:[#allocation2 + $0x70] sm:$0xff] 0.0
    %31 = vst [vmem:[#allocation2 + $0x78] sm:$0xff] 0.0
  $region13: #{esnn_sequence.2} parent=0 // pred_fallthru
    _
  %v32 = vld [vmem:[#allocation2] sm:$0xff]
  %v33 = vld [vmem:[#allocation2 + $0x8] sm:$0xff]
  %v34 = vld [vmem:[#allocation2 + $0x10] sm:$0xff]
  %v35 = vld [vmem:[#allocation2 + $0x18] sm:$0xff]
  %v36 = vld [vmem:[#allocation2 + $0x20] sm:$0xff]
  %v37 = vld [vmem:[#allocation2 + $0x28] sm:$0xff]
  %v38 = vld [vmem:[#allocation2 + $0x30] sm:$0xff]
  %v39 = vld [vmem:[#allocation2 + $0x38] sm:$0xff]
  %v40 = vld [vmem:[#allocation2 + $0x40] sm:$0xff]
  %v41 = vld [vmem:[#allocation2 + $0x48] sm:$0xff]
  %v42 = vld [vmem:[#allocation2 + $0x50] sm:$0xff]
  %v43 = vld [vmem:[#allocation2 + $0x58] sm:$0xff]
  %v44 = vld [vmem:[#allocation2 + $0x60] sm:$0xff]
  %v45 = vld [vmem:[#allocation2 + $0x68] sm:$0xff]
  %v46 = vld [vmem:[#allocation2 + $0x70] sm:$0xff]
  %v47 = vld [vmem:[#allocation2 + $0x78] sm:$0xff]
  %v48 = vld [vmem:[%s0] sm:$0xf]
  %v49 = vld [vmem:[%s0 + $0x4] sm:$0xf]
  %v50 = vld [vmem:[%s0 + $0x8] sm:$0xf]
  %v51 = vld [vmem:[%s0 + $0xc] sm:$0xf]
  %v52 = vld [vmem:[%s0 + $0x10] sm:$0xf]
  %v53 = vld [vmem:[%s0 + $0x14] sm:$0xf]
  %v54 = vld [vmem:[%s0 + $0x18] sm:$0xf]
  %v55 = vld [vmem:[%s0 + $0x1c] sm:$0xf]
  %v56 = vld [vmem:[%s0 + $0x20] sm:$0xf]
  %v57 = vld [vmem:[%s0 + $0x24] sm:$0xf]
  %v58 = vld [vmem:[%s0 + $0x28] sm:$0xf]
  %v59 = vld [vmem:[%s0 + $0x2c] sm:$0xf]
  %v60 = vld [vmem:[%s0 + $0x30] sm:$0xf]
  %v61 = vld [vmem:[%s0 + $0x34] sm:$0xf]
  %v62 = vld [vmem:[%s0 + $0x38] sm:$0xf]
  %v63 = vld [vmem:[%s0 + $0x3c] sm:$0xf]
  %v64 = vld [vmem:[%s1] sm:$0xf]
  %v65 = vld [vmem:[%s1 + $0x4] sm:$0xf]
  %v66 = vld [vmem:[%s1 + $0x8] sm:$0xf]
  %v67 = vld [vmem:[%s1 + $0xc] sm:$0xf]
  %v68 = vld [vmem:[%s1 + $0x10] sm:$0xf]
  %v69 = vld [vmem:[%s1 + $0x14] sm:$0xf]
  %v70 = vld [vmem:[%s1 + $0x18] sm:$0xf]
  %v71 = vld [vmem:[%s1 + $0x1c] sm:$0xf]
  %v72 = vld [vmem:[%s1 + $0x20] sm:$0xf]
  %v73 = vld [vmem:[%s1 + $0x24] sm:$0xf]
  %v74 = vld [vmem:[%s1 + $0x28] sm:$0xf]
  %v75 = vld [vmem:[%s1 + $0x2c] sm:$0xf]
  %v76 = vld [vmem:[%s1 + $0x30] sm:$0xf]
  %v77 = vld [vmem:[%s1 + $0x34] sm:$0xf]
  %v78 = vld [vmem:[%s1 + $0x38] sm:$0xf]
  %v79 = vld [vmem:[%s1 + $0x3c] sm:$0xf]
  %v96 = vunpack.c.l.b16 %v48
  %v97 = vunpack.c.l.b16 %v49
  %v98 = vunpack.c.l.b16 %v50
  %v99 = vunpack.c.l.b16 %v51
  %v100 = vunpack.c.l.b16 %v52
  %v101 = vunpack.c.l.b16 %v53
  %v102 = vunpack.c.l.b16 %v54
  %v103 = vunpack.c.l.b16 %v55
  %v104 = vunpack.c.l.b16 %v56
  %v105 = vunpack.c.l.b16 %v57
  %v106 = vunpack.c.l.b16 %v58
  %v107 = vunpack.c.l.b16 %v59
  %v108 = vunpack.c.l.b16 %v60
  %v109 = vunpack.c.l.b16 %v61
  %v110 = vunpack.c.l.b16 %v62
  %v111 = vunpack.c.l.b16 %v63
  %v112 = vpack.c.b16 %v97, %v96
  %v113 = vpack.c.b16 %v99, %v98
  %v114 = vpack.c.b16 %v101, %v100
  %v115 = vpack.c.b16 %v103, %v102
  %v116 = vpack.c.b16 %v105, %v104
  %v117 = vpack.c.b16 %v107, %v106
  %v118 = vpack.c.b16 %v109, %v108
  %v119 = vpack.c.b16 %v111, %v110
  %v144 = vunpack.c.l.b16 %v64
  %v145 = vunpack.c.l.b16 %v65
  %v146 = vunpack.c.l.b16 %v66
  %v147 = vunpack.c.l.b16 %v67
  %v148 = vunpack.c.l.b16 %v68
  %v149 = vunpack.c.l.b16 %v69
  %v150 = vunpack.c.l.b16 %v70
  %v151 = vunpack.c.l.b16 %v71
  %v152 = vunpack.c.l.b16 %v72
  %v153 = vunpack.c.l.b16 %v73
  %v154 = vunpack.c.l.b16 %v74
  %v155 = vunpack.c.l.b16 %v75
  %v156 = vunpack.c.l.b16 %v76
  %v157 = vunpack.c.l.b16 %v77
  %v158 = vunpack.c.l.b16 %v78
  %v159 = vunpack.c.l.b16 %v79
  %v160 = vpack.c.b16 %v145, %v144
  %v161 = vpack.c.b16 %v147, %v146
  %v162 = vpack.c.b16 %v149, %v148
  %v163 = vpack.c.b16 %v151, %v150
  %v164 = vpack.c.b16 %v153, %v152
  %v165 = vpack.c.b16 %v155, %v154
  %v166 = vpack.c.b16 %v157, %v156
  %v167 = vpack.c.b16 %v159, %v158
  %176 = vmatprep.subr.bf16.mxu0 0
  %177 = vmatpush1.bf16.msra.mxu0 %v167
  %178 = vmatprep.subr.bf16.mxu0 0
  %179 = vmatpush1.bf16.msra.mxu0 %v166
  %180 = vmatprep.subr.bf16.mxu0 0
  %181 = vmatpush1.bf16.msra.mxu0 %v165
  %182 = vmatprep.subr.bf16.mxu0 0
  %183 = vmatpush1.bf16.msra.mxu0 %v164
  %184 = vmatprep.subr.bf16.mxu0 0
  %185 = vmatpush1.bf16.msra.mxu0 %v163
  %186 = vmatprep.subr.bf16.mxu0 0
  %187 = vmatpush1.bf16.msra.mxu0 %v162
  %188 = vmatprep.subr.bf16.mxu0 0
  %189 = vmatpush1.bf16.msra.mxu0 %v161
  %190 = vmatprep.subr.bf16.mxu0 0
  %191 = vmatpush1.bf16.msra.mxu0 %v160
  %192 = vmatprep.subr.bf16.mxu0 0
  %193 = vmatpush2.bf16.msra.mxu0 0
  %194 = vmatprep.subr.bf16.mxu0 0
  %195 = vmatpush2.bf16.msra.mxu0 0
  %196 = vmatprep.subr.bf16.mxu0 0
  %197 = vmatpush2.bf16.msra.mxu0 0
  %198 = vmatprep.subr.bf16.mxu0 0
  %199 = vmatpush2.bf16.msra.mxu0 0
  %200 = vmatprep.subr.bf16.mxu0 0
  %201 = vmatpush2.bf16.msra.mxu0 0
  %202 = vmatprep.subr.bf16.mxu0 0
  %203 = vmatpush2.bf16.msra.mxu0 0
  %204 = vmatprep.subr.bf16.mxu0 0
  %205 = vmatpush2.bf16.msra.mxu0 0
  %206 = vmatprep.subr.bf16.mxu0 0
  %207 = vmatpush2.bf16.msra.mxu0 0
  %208 = vmatprep.mubr.bf16.mxu0 0
  %209 = vmatmul.mubr.bf16.gmra.mxu0 %v112
  %v210 = vpop.f32.mrf.mxu0
  %v211 = vadd.f32 0.0, %v210
  %v212 = vpop.f32.mrf.mxu0
  %v213 = vpop.f32.mrf.mxu0
  %v214 = vadd.f32 0.0, %v213
  %v215 = vpop.f32.mrf.mxu0
  %216 = vmatprep.mubr.bf16.mxu0 0
  %217 = vmatmul.mubr.bf16.gmra.mxu0 %v113
  %v218 = vpop.f32.mrf.mxu0
  %v219 = vadd.f32 0.0, %v218
  %v220 = vpop.f32.mrf.mxu0
  %v221 = vpop.f32.mrf.mxu0
  %v222 = vadd.f32 0.0, %v221
  %v223 = vpop.f32.mrf.mxu0
  %224 = vmatprep.mubr.bf16.mxu0 0
  %225 = vmatmul.mubr.bf16.gmra.mxu0 %v114
  %v226 = vpop.f32.mrf.mxu0
  %v227 = vadd.f32 0.0, %v226
  %v228 = vpop.f32.mrf.mxu0
  %v229 = vpop.f32.mrf.mxu0
  %v230 = vadd.f32 0.0, %v229
  %v231 = vpop.f32.mrf.mxu0
  %232 = vmatprep.mubr.bf16.mxu0 0
  %233 = vmatmul.mubr.bf16.gmra.mxu0 %v115
  %v234 = vpop.f32.mrf.mxu0
  %v235 = vadd.f32 0.0, %v234
  %v236 = vpop.f32.mrf.mxu0
  %v237 = vpop.f32.mrf.mxu0
  %v238 = vadd.f32 0.0, %v237
  %v239 = vpop.f32.mrf.mxu0
  %240 = vmatprep.mubr.bf16.mxu0 0
  %241 = vmatmul.mubr.bf16.gmra.mxu0 %v116
  %v242 = vpop.f32.mrf.mxu0
  %v243 = vadd.f32 0.0, %v242
  %v244 = vpop.f32.mrf.mxu0
  %v245 = vpop.f32.mrf.mxu0
  %v246 = vadd.f32 0.0, %v245
  %v247 = vpop.f32.mrf.mxu0
  %248 = vmatprep.mubr.bf16.mxu0 0
  %249 = vmatmul.mubr.bf16.gmra.mxu0 %v117
  %v250 = vpop.f32.mrf.mxu0
  %v251 = vadd.f32 0.0, %v250
  %v252 = vpop.f32.mrf.mxu0
  %v253 = vpop.f32.mrf.mxu0
  %v254 = vadd.f32 0.0, %v253
  %v255 = vpop.f32.mrf.mxu0
  %256 = vmatprep.mubr.bf16.mxu0 0
  %257 = vmatmul.mubr.bf16.gmra.mxu0 %v118
  %v258 = vpop.f32.mrf.mxu0
  %v259 = vadd.f32 0.0, %v258
  %v260 = vpop.f32.mrf.mxu0
  %v261 = vpop.f32.mrf.mxu0
  %v262 = vadd.f32 0.0, %v261
  %v263 = vpop.f32.mrf.mxu0
  %264 = vmatprep.mubr.bf16.mxu0 0
  %265 = vmatmul.mubr.bf16.gmra.mxu0 %v119
  %v266 = vpop.f32.mrf.mxu0
  %v267 = vadd.f32 0.0, %v266
  %v268 = vpop.f32.mrf.mxu0
  %v269 = vpop.f32.mrf.mxu0
  %v270 = vadd.f32 0.0, %v269
  %v271 = vpop.f32.mrf.mxu0
  %272 = vdwg.mxu0
  %v273 = vadd.f32 %v32, %v211
  %v274 = vadd.f32 %v33, %v214
  %v275 = vadd.f32 %v34, %v219
  %v276 = vadd.f32 %v35, %v222
  %v277 = vadd.f32 %v36, %v227
  %v278 = vadd.f32 %v37, %v230
  %v279 = vadd.f32 %v38, %v235
  %v280 = vadd.f32 %v39, %v238
  %v281 = vadd.f32 %v40, %v243
  %v282 = vadd.f32 %v41, %v246
  %v283 = vadd.f32 %v42, %v251
  %v284 = vadd.f32 %v43, %v254
  %v285 = vadd.f32 %v44, %v259
  %v286 = vadd.f32 %v45, %v262
  %v287 = vadd.f32 %v46, %v267
  %v288 = vadd.f32 %v47, %v270
  %289 = vst [vmem:[#allocation2] sm:$0xff] %v273
  %290 = vst [vmem:[#allocation2 + $0x8] sm:$0xff] %v274
  %291 = vst [vmem:[#allocation2 + $0x10] sm:$0xff] %v275
  %292 = vst [vmem:[#allocation2 + $0x18] sm:$0xff] %v276
  %293 = vst [vmem:[#allocation2 + $0x20] sm:$0xff] %v277
  %294 = vst [vmem:[#allocation2 + $0x28] sm:$0xff] %v278
  %295 = vst [vmem:[#allocation2 + $0x30] sm:$0xff] %v279
  %296 = vst [vmem:[#allocation2 + $0x38] sm:$0xff] %v280
  %297 = vst [vmem:[#allocation2 + $0x40] sm:$0xff] %v281
  %298 = vst [vmem:[#allocation2 + $0x48] sm:$0xff] %v282
  %299 = vst [vmem:[#allocation2 + $0x50] sm:$0xff] %v283
  %300 = vst [vmem:[#allocation2 + $0x58] sm:$0xff] %v284
  %301 = vst [vmem:[#allocation2 + $0x60] sm:$0xff] %v285
  %302 = vst [vmem:[#allocation2 + $0x68] sm:$0xff] %v286
  %303 = vst [vmem:[#allocation2 + $0x70] sm:$0xff] %v287
  %304 = vst [vmem:[#allocation2 + $0x78] sm:$0xff] %v288
  // Predicated region
  $region14: #{esnn_sequence.2} parent=0 // pred_check
    %p305 = pneg %p12
  $region15: #{esnn_sequence.2} parent=0 // pred_check_branch
    %307 = sbr.rel (%p305) target = $region17
  $region16: #{esnn_sequence.2} parent=0 // pred_region
    %v308 = vld [vmem:[#allocation2] sm:$0xff]
    %v309 = vld [vmem:[#allocation2 + $0x8] sm:$0xff]
    %v310 = vld [vmem:[#allocation2 + $0x10] sm:$0xff]
    %v311 = vld [vmem:[#allocation2 + $0x18] sm:$0xff]
    %v312 = vld [vmem:[#allocation2 + $0x20] sm:$0xff]
    %v313 = vld [vmem:[#allocation2 + $0x28] sm:$0xff]
    %v314 = vld [vmem:[#allocation2 + $0x30] sm:$0xff]
    %v315 = vld [vmem:[#allocation2 + $0x38] sm:$0xff]
    %v316 = vld [vmem:[#allocation2 + $0x40] sm:$0xff]
    %v317 = vld [vmem:[#allocation2 + $0x48] sm:$0xff]
    %v318 = vld [vmem:[#allocation2 + $0x50] sm:$0xff]
    %v319 = vld [vmem:[#allocation2 + $0x58] sm:$0xff]
    %v320 = vld [vmem:[#allocation2 + $0x60] sm:$0xff]
    %v321 = vld [vmem:[#allocation2 + $0x68] sm:$0xff]
    %v322 = vld [vmem:[#allocation2 + $0x70] sm:$0xff]
    %v323 = vld [vmem:[#allocation2 + $0x78] sm:$0xff]
    %324 = vst [vmem:[%s2] sm:$0xff] %v308
    %325 = vst [vmem:[%s2 + $0x8] sm:$0xff] %v309
    %326 = vst [vmem:[%s2 + $0x10] sm:$0xff] %v310
    %327 = vst [vmem:[%s2 + $0x18] sm:$0xff] %v311
    %328 = vst [vmem:[%s2 + $0x20] sm:$0xff] %v312
    %329 = vst [vmem:[%s2 + $0x28] sm:$0xff] %v313
    %330 = vst [vmem:[%s2 + $0x30] sm:$0xff] %v314
    %331 = vst [vmem:[%s2 + $0x38] sm:$0xff] %v315
    %332 = vst [vmem:[%s2 + $0x40] sm:$0xff] %v316
    %333 = vst [vmem:[%s2 + $0x48] sm:$0xff] %v317
    %334 = vst [vmem:[%s2 + $0x50] sm:$0xff] %v318
    %335 = vst [vmem:[%s2 + $0x58] sm:$0xff] %v319
    %336 = vst [vmem:[%s2 + $0x60] sm:$0xff] %v320
    %337 = vst [vmem:[%s2 + $0x68] sm:$0xff] %v321
    %338 = vst [vmem:[%s2 + $0x70] sm:$0xff] %v322
    %339 = vst [vmem:[%s2 + $0x78] sm:$0xff] %v323
  $region17: #{esnn_sequence.2} parent=0 // pred_fallthru
    _
  // Predicated region
  $region18: #{esnn_sequence.2} parent=0 // pred_check
    _
  $region19: #{esnn_sequence.2} parent=0 // pred_check_branch
    %341 = sbr.rel (0) target = $region21
  $region20: #{esnn_sequence.2} parent=0 // pred_region
    _
  $region21: #{esnn_sequence.2} parent=0 // pred_fallthru
    _
  // Predicated region
  $region22: #{esnn_sequence.2} parent=0 // pred_check
    _
  $region23: #{esnn_sequence.2} parent=0 // pred_check_branch
    %343 = sbr.rel (0) target = $region25
  $region24: #{esnn_sequence.2} parent=0 // pred_region
    _
  $region25: #{esnn_sequence.2} parent=0 // pred_fallthru
    _

// kernel: esnn_sequence.3
$region0: #{esnn_sequence.3}
  #allocation0 [shape = 'u32[]', space=smem, size = 0x4, offset = 0x4, fixed_abs, tag = 'smem constant byte address 0x4 - core index']
  #allocation1 [shape = 'u32[144,128]{1,0:T(1,128)}', space=vmem, size = 0x12000, scoped, tag = 'internal scratch']
  #allocation2 [shape = 'f32[16,128]{1,0:T(8,128)}', space=vmem, size = 0x2000, scoped, tag = 'scratch operand']
  #allocation3 [shape = 'f32[16,128]{1,0:T(8,128)}', space=vmem, size = 0x2000, scoped, tag = 'scratch operand']
  #allocation4 [shape = 'f32[16,128]{1,0:T(8,128)}', space=vmem, size = 0x2000, scoped, tag = 'scratch operand']
  %s0 = inlined_call_operand.vmem [shape: f32[4], index: 0, kind: input, shape index: {}]
  %s1 = inlined_call_operand.vmem [shape: f32[8,16,128], index: 1, kind: input, shape index: {}]
  %s2 = inlined_call_operand.vmem [shape: f32[16,128], index: 2, kind: input, shape index: {}, may-alias: {2,6}]
  %s3 = inlined_call_operand.vmem [shape: f32[16,128], index: 3, kind: input, shape index: {}]
  %s4 = inlined_call_operand.vmem [shape: f32[16,128], index: 4, kind: input, shape index: {}]
  %s5 = inlined_call_operand.vmem [shape: bf16[8,16,128], index: 5, kind: output, shape index: {0}]
  %s6 = inlined_call_operand.vmem [shape: f32[16,128], index: 6, kind: output, shape index: {1}, may-alias: {2,6}]
  %7 = xla_tuple %s5, %s6
  %s8 = sld [smem:[#allocation0]]
  $region46: #{esnn_sequence.3} parent=0
    _
  %s10 = ssub.s32 1, %s8
  %s11 = scalar_select 0, %s10, %s8
  $region1: #{esnn_sequence.3} parent=0
    #allocation5 [shape = 'u8[512]{0}', space=smem, size = 0x200, scoped, tag = 'input window, operand 0, single buffered']
    #allocation6 [shape = 's32[1]{0}', space=sflag, size = 0x4, scoped, tag = 'scoped memory for esnn_sequence.3']
    %12 = vsyncpa [#allocation6], 0
    // Predicated region
    $region2: #{esnn_sequence.3} parent=1 // pred_check
      _
    $region3: #{esnn_sequence.3} parent=1 // pred_check_branch
      %14 = sbr.rel (0) target = $region5
    $region4: #{esnn_sequence.3} parent=1 // pred_region
      %s16 = ssub.s32 16, 16
      %17 = vsyncadd [#allocation6], %s16
      %s19 = sshll.u32 %s0, 4
      %s20 = int_to_ptr.vmem [resolvable:$true] %s19
      %22 = dma.vmem_to_smem %s20, 16, [#allocation5], [#allocation6]
    $region5: #{esnn_sequence.3} parent=1 // pred_fallthru
      _
    // Predicated region
    $region6: #{esnn_sequence.3} parent=1 // pred_check
      _
    $region7: #{esnn_sequence.3} parent=1 // pred_check_branch
      %24 = sbr.rel (0) target = $region9
    $region8: #{esnn_sequence.3} parent=1 // pred_region
      _
    $region9: #{esnn_sequence.3} parent=1 // pred_fallthru
      _
    // Predicated region
    $region10: #{esnn_sequence.3} parent=1 // pred_check
      _
    $region11: #{esnn_sequence.3} parent=1 // pred_check_branch
      %26 = sbr.rel (0) target = $region13
    $region12: #{esnn_sequence.3} parent=1 // pred_region
      _
    $region13: #{esnn_sequence.3} parent=1 // pred_fallthru
      _
    // Predicated region
    $region14: #{esnn_sequence.3} parent=1 // pred_check
      _
    $region15: #{esnn_sequence.3} parent=1 // pred_check_branch
      %28 = sbr.rel (0) target = $region17
    $region16: #{esnn_sequence.3} parent=1 // pred_region
      _
    $region17: #{esnn_sequence.3} parent=1 // pred_fallthru
      _
    // Predicated region
    $region18: #{esnn_sequence.3} parent=1 // pred_check
      _
    $region19: #{esnn_sequence.3} parent=1 // pred_check_branch
      %30 = sbr.rel (0) target = $region21
    $region20: #{esnn_sequence.3} parent=1 // pred_region
      _
    $region21: #{esnn_sequence.3} parent=1 // pred_fallthru
      _
    // Predicated region
    $region22: #{esnn_sequence.3} parent=1 // pred_check
      _
    $region23: #{esnn_sequence.3} parent=1 // pred_check_branch
      %32 = sbr.rel (0) target = $region25
    $region24: #{esnn_sequence.3} parent=1 // pred_region
      %33 = dma.done [#allocation6], 16
    $region25: #{esnn_sequence.3} parent=1 // pred_fallthru
      _
    %34 = sfence
    %p35 = scmp.eq.s32.totalorder 0, 0
    // Predicated region
    $region26: #{esnn_sequence.3} parent=1 // pred_check
      %p36 = pneg %p35
    $region27: #{esnn_sequence.3} parent=1 // pred_check_branch
      %38 = sbr.rel (%p36) target = $region29
    $region28: #{esnn_sequence.3} parent=1 // pred_region
      %v39 = vld [vmem:[%s2] sm:$0xff]
      %v40 = vld [vmem:[%s2 + $0x8] sm:$0xff]
      %41 = vst [vmem:[#allocation2] sm:$0xff] %v39
      %42 = vst [vmem:[#allocation2 + $0x8] sm:$0xff] %v40
      %v43 = vld [vmem:[%s3] sm:$0xff]
      %v44 = vld [vmem:[%s3 + $0x8] sm:$0xff]
      %45 = vst [vmem:[#allocation3] sm:$0xff] %v43
      %46 = vst [vmem:[#allocation3 + $0x8] sm:$0xff] %v44
      %v47 = vld [vmem:[%s4] sm:$0xff]
      %v48 = vld [vmem:[%s4 + $0x8] sm:$0xff]
      %49 = vst [vmem:[#allocation4] sm:$0xff] %v47
      %50 = vst [vmem:[#allocation4 + $0x8] sm:$0xff] %v48
    $region29: #{esnn_sequence.3} parent=1 // pred_fallthru
      _
    %s51 = sld [smem:[#allocation5]]
    %s52 = sld [smem:[#allocation5 + $0x1]]
    %s53 = sld [smem:[#allocation5 + $0x2]]
    %s54 = sld [smem:[#allocation5 + $0x3]]
    %v55 = vld [vmem:[#allocation2] sm:$0xff]
    %v56 = vld [vmem:[#allocation2 + $0x8] sm:$0xff]
    %v57 = vld [vmem:[#allocation3] sm:$0xff]
    %v58 = vld [vmem:[#allocation3 + $0x8] sm:$0xff]
    %v59 = vld [vmem:[#allocation4] sm:$0xff]
    %v60 = vld [vmem:[#allocation4 + $0x8] sm:$0xff]
    %v61 = vstv %s51
    %v62 = vmul.f32 %v61, %v57
    %v63 = vmul.f32 %v61, %v58
    %v64 = vld [vmem:[%s1] sm:$0xff]
    %v65 = vld [vmem:[%s1 + $0x8] sm:$0xff]
    %v66 = vstv %s52
    %v67 = vmul.f32 %v66, %v64
    %v68 = vmul.f32 %v66, %v65
    %v69 = vadd.f32 %v62, %v67
    %v70 = vadd.f32 %v63, %v68
    %v71 = vstv %s54
    %v72 = vmul.f32 %v71, %v55
    %v73 = vmul.f32 %v71, %v56
    %v74 = vadd.f32 %v72, %v69
    %v75 = vadd.f32 %v73, %v70
    %v76 = vstv %s53
    %v77 = vmul.f32 %v76, %v59
    %v78 = vmul.f32 %v76, %v60
    %v79 = vsub.f32 %v74, %v77
    %v80 = vsub.f32 %v75, %v78
    %vm81 = vcmp.gt.f32.partialorder %v79, 1.0
    %vm82 = vcmp.gt.f32.partialorder %v80, 1.0
    %v83 = vsel %vm81, 1, 0
    %v84 = vsel %vm82, 1, 0
    %v85 = vcvt.s32.f32 %v83
    %v86 = vcvt.s32.f32 %v84
    %v87 = vpack.c.bf16 %v86, %v85
    %v89 = vunpack.c.l.b16 %v87
    %v90 = vunpack.c.h.b16 %v87
    %v91 = vpack.c.b16 %v89, %v89
    %v92 = vpack.c.b16 %v90, %v90
    %95 = vst [vmem:[%s5] sm:$0xf] %v91
    %96 = vst [vmem:[%s5 + $0x4] sm:$0xf] %v92
    %v97 = vmul.f32 %v61, %v69
    %v98 = vmul.f32 %v61, %v70
    %s99 = scalar_lea.vmem %s1, 16
    %v100 = vld [vmem:[%s99] sm:$0xff]
    %v101 = vld [vmem:[%s99 + $0x8] sm:$0xff]
    %v102 = vmul.f32 %v66, %v100
    %v103 = vmul.f32 %v66, %v101
    %v104 = vadd.f32 %v97, %v102
    %v105 = vadd.f32 %v98, %v103
    %v106 = vmul.f32 %v71, %v79
    %v107 = vmul.f32 %v71, %v80
    %v108 = vadd.f32 %v106, %v104
    %v109 = vadd.f32 %v107, %v105
    %v110 = vmul.f32 %v76, %v85
    %v111 = vmul.f32 %v76, %v86
    %v112 = vsub.f32 %v108, %v110
    %v113 = vsub.f32 %v109, %v111
    %vm114 = vcmp.gt.f32.partialorder %v112, 1.0
    %vm115 = vcmp.gt.f32.partialorder %v113, 1.0
    %v116 = vsel %vm114, 1, 0
    %v117 = vsel %vm115, 1, 0
    %v118 = vcvt.s32.f32 %v116
    %v119 = vcvt.s32.f32 %v117
    %v120 = vpack.c.bf16 %v119, %v118
    %v122 = vunpack.c.l.b16 %v120
    %v123 = vunpack.c.h.b16 %v120
    %v124 = vpack.c.b16 %v122, %v122
    %v125 = vpack.c.b16 %v123, %v123
    %s128 = scalar_lea.vmem %s5, 8
    %129 = vst [vmem:[%s128] sm:$0xf] %v124
    %130 = vst [vmem:[%s128 + $0x4] sm:$0xf] %v125
    %v131 = vmul.f32 %v61, %v104
    %v132 = vmul.f32 %v61, %v105
    %s133 = scalar_lea.vmem %s1, 32
    %v134 = vld [vmem:[%s133] sm:$0xff]
    %v135 = vld [vmem:[%s133 + $0x8] sm:$0xff]
    %v136 = vmul.f32 %v66, %v134
    %v137 = vmul.f32 %v66, %v135
    %v138 = vadd.f32 %v131, %v136
    %v139 = vadd.f32 %v132, %v137
    %v140 = vmul.f32 %v71, %v112
    %v141 = vmul.f32 %v71, %v113
    %v142 = vadd.f32 %v140, %v138
    %v143 = vadd.f32 %v141, %v139
    %v144 = vmul.f32 %v76, %v118
    %v145 = vmul.f32 %v76, %v119
    %v146 = vsub.f32 %v142, %v144
    %v147 = vsub.f32 %v143, %v145
    %vm148 = vcmp.gt.f32.partialorder %v146, 1.0
    %vm149 = vcmp.gt.f32.partialorder %v147, 1.0
    %v150 = vsel %vm148, 1, 0
    %v151 = vsel %vm149, 1, 0
    %v152 = vcvt.s32.f32 %v150
    %v153 = vcvt.s32.f32 %v151
    %v154 = vpack.c.bf16 %v153, %v152
    %v156 = vunpack.c.l.b16 %v154
    %v157 = vunpack.c.h.b16 %v154
    %v158 = vpack.c.b16 %v156, %v156
    %v159 = vpack.c.b16 %v157, %v157
    %s162 = scalar_lea.vmem %s5, 16
    %163 = vst [vmem:[%s162] sm:$0xf] %v158
    %164 = vst [vmem:[%s162 + $0x4] sm:$0xf] %v159
    %v165 = vmul.f32 %v61, %v138
    %v166 = vmul.f32 %v61, %v139
    %s167 = scalar_lea.vmem %s1, 48
    %v168 = vld [vmem:[%s167] sm:$0xff]
    %v169 = vld [vmem:[%s167 + $0x8] sm:$0xff]
    %v170 = vmul.f32 %v66, %v168
    %v171 = vmul.f32 %v66, %v169
    %v172 = vadd.f32 %v165, %v170
    %v173 = vadd.f32 %v166, %v171
    %v174 = vmul.f32 %v71, %v146
    %v175 = vmul.f32 %v71, %v147
    %v176 = vadd.f32 %v174, %v172
    %v177 = vadd.f32 %v175, %v173
    %v178 = vmul.f32 %v76, %v152
    %v179 = vmul.f32 %v76, %v153
    %v180 = vsub.f32 %v176, %v178
    %v181 = vsub.f32 %v177, %v179
    %vm182 = vcmp.gt.f32.partialorder %v180, 1.0
    %vm183 = vcmp.gt.f32.partialorder %v181, 1.0
    %v184 = vsel %vm182, 1, 0
    %v185 = vsel %vm183, 1, 0
    %v186 = vcvt.s32.f32 %v184
    %v187 = vcvt.s32.f32 %v185
    %v188 = vpack.c.bf16 %v187, %v186
    %v190 = vunpack.c.l.b16 %v188
    %v191 = vunpack.c.h.b16 %v188
    %v192 = vpack.c.b16 %v190, %v190
    %v193 = vpack.c.b16 %v191, %v191
    %s196 = scalar_lea.vmem %s5, 24
    %197 = vst [vmem:[%s196] sm:$0xf] %v192
    %198 = vst [vmem:[%s196 + $0x4] sm:$0xf] %v193
    %v199 = vmul.f32 %v61, %v172
    %v200 = vmul.f32 %v61, %v173
    %s201 = scalar_lea.vmem %s1, 64
    %v202 = vld [vmem:[%s201] sm:$0xff]
    %v203 = vld [vmem:[%s201 + $0x8] sm:$0xff]
    %v204 = vmul.f32 %v66, %v202
    %v205 = vmul.f32 %v66, %v203
    %v206 = vadd.f32 %v199, %v204
    %v207 = vadd.f32 %v200, %v205
    %v208 = vmul.f32 %v71, %v180
    %v209 = vmul.f32 %v71, %v181
    %v210 = vadd.f32 %v208, %v206
    %v211 = vadd.f32 %v209, %v207
    %v212 = vmul.f32 %v76, %v186
    %v213 = vmul.f32 %v76, %v187
    %v214 = vsub.f32 %v210, %v212
    %v215 = vsub.f32 %v211, %v213
    %vm216 = vcmp.gt.f32.partialorder %v214, 1.0
    %vm217 = vcmp.gt.f32.partialorder %v215, 1.0
    %v218 = vsel %vm216, 1, 0
    %v219 = vsel %vm217, 1, 0
    %v220 = vcvt.s32.f32 %v218
    %v221 = vcvt.s32.f32 %v219
    %v222 = vpack.c.bf16 %v221, %v220
    %v224 = vunpack.c.l.b16 %v222
    %v225 = vunpack.c.h.b16 %v222
    %v226 = vpack.c.b16 %v224, %v224
    %v227 = vpack.c.b16 %v225, %v225
    %s230 = scalar_lea.vmem %s5, 32
    %231 = vst [vmem:[%s230] sm:$0xf] %v226
    %232 = vst [vmem:[%s230 + $0x4] sm:$0xf] %v227
    %v233 = vmul.f32 %v61, %v206
    %v234 = vmul.f32 %v61, %v207
    %s235 = scalar_lea.vmem %s1, 80
    %v236 = vld [vmem:[%s235] sm:$0xff]
    %v237 = vld [vmem:[%s235 + $0x8] sm:$0xff]
    %v238 = vmul.f32 %v66, %v236
    %v239 = vmul.f32 %v66, %v237
    %v240 = vadd.f32 %v233, %v238
    %v241 = vadd.f32 %v234, %v239
    %v242 = vmul.f32 %v71, %v214
    %v243 = vmul.f32 %v71, %v215
    %v244 = vadd.f32 %v242, %v240
    %v245 = vadd.f32 %v243, %v241
    %v246 = vmul.f32 %v76, %v220
    %v247 = vmul.f32 %v76, %v221
    %v248 = vsub.f32 %v244, %v246
    %v249 = vsub.f32 %v245, %v247
    %vm250 = vcmp.gt.f32.partialorder %v248, 1.0
    %vm251 = vcmp.gt.f32.partialorder %v249, 1.0
    %v252 = vsel %vm250, 1, 0
    %v253 = vsel %vm251, 1, 0
    %v254 = vcvt.s32.f32 %v252
    %v255 = vcvt.s32.f32 %v253
    %v256 = vpack.c.bf16 %v255, %v254
    %v258 = vunpack.c.l.b16 %v256
    %v259 = vunpack.c.h.b16 %v256
    %v260 = vpack.c.b16 %v258, %v258
    %v261 = vpack.c.b16 %v259, %v259
    %s264 = scalar_lea.vmem %s5, 40
    %265 = vst [vmem:[%s264] sm:$0xf] %v260
    %266 = vst [vmem:[%s264 + $0x4] sm:$0xf] %v261
    %v267 = vmul.f32 %v61, %v240
    %v268 = vmul.f32 %v61, %v241
    %s269 = scalar_lea.vmem %s1, 96
    %v270 = vld [vmem:[%s269] sm:$0xff]
    %v271 = vld [vmem:[%s269 + $0x8] sm:$0xff]
    %v272 = vmul.f32 %v66, %v270
    %v273 = vmul.f32 %v66, %v271
    %v274 = vadd.f32 %v267, %v272
    %v275 = vadd.f32 %v268, %v273
    %v276 = vmul.f32 %v71, %v248
    %v277 = vmul.f32 %v71, %v249
    %v278 = vadd.f32 %v276, %v274
    %v279 = vadd.f32 %v277, %v275
    %v280 = vmul.f32 %v76, %v254
    %v281 = vmul.f32 %v76, %v255
    %v282 = vsub.f32 %v278, %v280
    %v283 = vsub.f32 %v279, %v281
    %vm284 = vcmp.gt.f32.partialorder %v282, 1.0
    %vm285 = vcmp.gt.f32.partialorder %v283, 1.0
    %v286 = vsel %vm284, 1, 0
    %v287 = vsel %vm285, 1, 0
    %v288 = vcvt.s32.f32 %v286
    %v289 = vcvt.s32.f32 %v287
    %v290 = vpack.c.bf16 %v289, %v288
    %v292 = vunpack.c.l.b16 %v290
    %v293 = vunpack.c.h.b16 %v290
    %v294 = vpack.c.b16 %v292, %v292
    %v295 = vpack.c.b16 %v293, %v293
    %s298 = scalar_lea.vmem %s5, 48
    %299 = vst [vmem:[%s298] sm:$0xf] %v294
    %300 = vst [vmem:[%s298 + $0x4] sm:$0xf] %v295
    %v301 = vmul.f32 %v61, %v274
    %v302 = vmul.f32 %v61, %v275
    %s303 = scalar_lea.vmem %s1, 112
    %v304 = vld [vmem:[%s303] sm:$0xff]
    %v305 = vld [vmem:[%s303 + $0x8] sm:$0xff]
    %v306 = vmul.f32 %v66, %v304
    %v307 = vmul.f32 %v66, %v305
    %v308 = vadd.f32 %v301, %v306
    %v309 = vadd.f32 %v302, %v307
    %v310 = vmul.f32 %v71, %v282
    %v311 = vmul.f32 %v71, %v283
    %v312 = vadd.f32 %v310, %v308
    %v313 = vadd.f32 %v311, %v309
    %v314 = vmul.f32 %v76, %v288
    %v315 = vmul.f32 %v76, %v289
    %v316 = vsub.f32 %v312, %v314
    %v317 = vsub.f32 %v313, %v315
    %vm318 = vcmp.gt.f32.partialorder %v316, 1.0
    %vm319 = vcmp.gt.f32.partialorder %v317, 1.0
    %v320 = vsel %vm318, 1, 0
    %v321 = vsel %vm319, 1, 0
    %v322 = vcvt.s32.f32 %v320
    %v323 = vcvt.s32.f32 %v321
    %v324 = vpack.c.bf16 %v323, %v322
    %v326 = vunpack.c.l.b16 %v324
    %v327 = vunpack.c.h.b16 %v324
    %v328 = vpack.c.b16 %v326, %v326
    %v329 = vpack.c.b16 %v327, %v327
    %s332 = scalar_lea.vmem %s5, 56
    %333 = vst [vmem:[%s332] sm:$0xf] %v328
    %334 = vst [vmem:[%s332 + $0x4] sm:$0xf] %v329
    %335 = vst [vmem:[#allocation2] sm:$0xff] %v316
    %336 = vst [vmem:[#allocation2 + $0x8] sm:$0xff] %v317
    %337 = vst [vmem:[#allocation3] sm:$0xff] %v308
    %338 = vst [vmem:[#allocation3 + $0x8] sm:$0xff] %v309
    %339 = vst [vmem:[#allocation4] sm:$0xff] %v322
    %340 = vst [vmem:[#allocation4 + $0x8] sm:$0xff] %v323
    %341 = vst [vmem:[%s6] sm:$0xff] %v316
    %342 = vst [vmem:[%s6 + $0x8] sm:$0xff] %v317
    // Predicated region
    $region30: #{esnn_sequence.3} parent=1 // pred_check
      _
    $region31: #{esnn_sequence.3} parent=1 // pred_check_branch
      %344 = sbr.rel (0) target = $region33
    $region32: #{esnn_sequence.3} parent=1 // pred_region
      _
    $region33: #{esnn_sequence.3} parent=1 // pred_fallthru
      _
    // Predicated region
    $region34: #{esnn_sequence.3} parent=1 // pred_check
      _
    $region35: #{esnn_sequence.3} parent=1 // pred_check_branch
      %346 = sbr.rel (0) target = $region37
    $region36: #{esnn_sequence.3} parent=1 // pred_region
      _
    $region37: #{esnn_sequence.3} parent=1 // pred_fallthru
      _
    // Predicated region
    $region38: #{esnn_sequence.3} parent=1 // pred_check
      _
    $region39: #{esnn_sequence.3} parent=1 // pred_check_branch
      %348 = sbr.rel (0) target = $region41
    $region40: #{esnn_sequence.3} parent=1 // pred_region
      _
    $region41: #{esnn_sequence.3} parent=1 // pred_fallthru
      _
    // Predicated region
    $region42: #{esnn_sequence.3} parent=1 // pred_check
      _
    $region43: #{esnn_sequence.3} parent=1 // pred_check_branch
      %350 = sbr.rel (0) target = $region45
    $region44: #{esnn_sequence.3} parent=1 // pred_region
      _
    $region45: #{esnn_sequence.3} parent=1 // pred_fallthru
      _
    %351 = vsyncpa [#allocation6], 1

</llo_original>
